<compile_context>
chip_gen: v6e
topology: v6e:2x2x1
jax: 0.10.0
libtpu: 0.0.40
codegen_flags: <defaults>
</compile_context>

<pallas_src>
import functools
import random

import jax
import jax.numpy as jnp
from jax.experimental import pallas as pl
from jax.experimental.pallas import tpu as pltpu

H, W, C_IN, C_OUT, K = 7, 7, 128, 32, 3
HW = H * W


def _lane_roll(a, shift):
    """torch.roll semantics (out[..., p] = in[..., p - shift]) along the last
    axis for a *static* shift; two lane slices + one concatenate on the whole
    block (pltpu.roll needs a 128-aligned lane dim, which 49 is not)."""
    n = a.shape[-1]
    s = shift % n
    if s == 0:
        return a
    return jnp.concatenate([a[..., n - s:], a[..., :n - s]], axis=-1)


def _fused_kernel(x_ref, w_ref, o_ref, *, shift):
    # x_ref: (C_IN, HW) f32   — channels on sublanes, p = h*7 + w on lanes
    # w_ref: (C_OUT, K*C_IN)  — w_ref[j, k*C_IN + i] == weight[j, k, i]
    # o_ref: (C_OUT, HW) f32
    x = x_ref[...]

    # Column index m = p % 7 at (1, HW): exact floor(p/7) via multiply+shift
    # (p <= 48, 9363 = ceil(2^16 / 7)), so no vector integer division needed.
    p = jax.lax.broadcasted_iota(jnp.int32, (1, HW), 1)
    q = (p * 9363) >> 16              # == p // 7 for p in [0, 48]
    m = p - W * q                     # (1, HW) int32, values 0..6

    # --- torch.roll along W: wrap within each row of 7 lanes ---------------
    s = shift % W
    if s == 0:
        xr = x
    else:
        xr = jnp.where(m >= s, _lane_roll(x, s), _lane_roll(x, s - W))

    # --- conv taps along W with zero padding (no wrap) ---------------------
    # A ±1 flat lane shift pulls one value across the row boundary exactly at
    # the column the zero padding kills, so one (1,HW) mask per tap suffices.
    x_m1 = jnp.where(m == 0, 0.0, _lane_roll(xr, 1))        # tap k=0 (w-1)
    x_p1 = jnp.where(m == W - 1, 0.0, _lane_roll(xr, -1))   # tap k=2 (w+1)

    # --- three accumulated K=128 MXU dots (no (384,49) tap materialization) -
    y = jnp.dot(w_ref[:, 0:C_IN], x_m1, preferred_element_type=jnp.float32)
    y += jnp.dot(w_ref[:, C_IN:2 * C_IN], xr, preferred_element_type=jnp.float32)
    y += jnp.dot(w_ref[:, 2 * C_IN:3 * C_IN], x_p1, preferred_element_type=jnp.float32)

    # --- torch.roll along H == exact flat lane roll by 7*shift -------------
    o_ref[...] = _lane_roll(y, W * shift).astype(o_ref.dtype)


@functools.partial(jax.jit, static_argnums=(2,))
def kernel_generated_3_forward(x_nchw, weight_jki, shift):
    """x_nchw: (1, 128, 7, 7) f32, weight_jki: (32, 3, 128) f32, shift: int."""
    x_flat = x_nchw.reshape(C_IN, HW)              # free reshape (no transpose)
    w_cat = weight_jki.reshape(C_OUT, K * C_IN)    # free reshape: [j, k*128+i]
    out_flat = pl.pallas_call(
        functools.partial(_fused_kernel, shift=int(shift)),
        grid=(1,),
        in_specs=[
            pl.BlockSpec((C_IN, HW), lambda i: (0, 0)),
            pl.BlockSpec((C_OUT, K * C_IN), lambda i: (0, 0)),
        ],
        out_specs=pl.BlockSpec((C_OUT, HW), lambda i: (0, 0)),
        out_shape=jax.ShapeDtypeStruct((C_OUT, HW), jnp.float32),
        compiler_params=pltpu.CompilerParams(dimension_semantics=("arbitrary",)),
        cost_estimate=pl.CostEstimate(
            flops=2 * C_OUT * K * C_IN * HW,
            transcendentals=0,
            bytes_accessed=4 * (C_IN * HW + C_OUT * K * C_IN + C_OUT * HW),
        ),
    )(x_flat, w_cat)
    return out_flat.reshape(1, C_OUT, H, W)        # free reshape


def ref_forward(x, w, shift):
    """Pure-JAX reference reproducing the PyTorch graph exactly."""
    xr = jnp.roll(x, shift, axis=3)                                        # (1,128,7,7)
    xp = jnp.pad(xr, ((0, 0), (0, 0), (0, 0), (1, 1)))
    patches = jnp.stack([xp[..., k:k + W] for k in range(K)], axis=2)      # (1,128,3,7,7)
    y = jnp.einsum('liknm,jki->ljnm', patches, w)                          # (1,32,7,7)
    return jnp.roll(y, shift, axis=2)


if __name__ == "__main__":
    # Replicate the module's shift_direction draw deterministically.
    random.seed(0)
    shift_direction = int((random.random() > 0.5) * 2 - 1)

    key = jax.random.PRNGKey(0)
    kx, kw = jax.random.split(key)
    x = jax.random.normal(kx, (1, C_IN, H, W), dtype=jnp.float32)          # NCHW input
    weight = jax.random.normal(kw, (C_OUT, K, C_IN), dtype=jnp.float32)    # (32, 3, 128)

    ok = True
    for sh in (shift_direction, -shift_direction):   # check both roll directions
        y = jax.block_until_ready(kernel_generated_3_forward(x, weight, sh))
        y_ref = ref_forward(x, weight, sh)
        ok = ok and (y.shape == (1, C_OUT, H, W))
        ok = ok and bool(jnp.allclose(y, y_ref, atol=1e-3, rtol=1e-3))
    assert ok, "mismatch vs reference"
    print("KERNEL_OK")
</pallas_src>

<mosaic_0001>
module attributes {stable_mosaic.version = 11 : i64} {
  func.func @_fused_kernel(%arg0: i32, %arg1: memref<128x49xf32, #tpu.memory_space<vmem>>, %arg2: memref<32x384xf32, #tpu.memory_space<vmem>>, %arg3: memref<32x49xf32, #tpu.memory_space<vmem>>) attributes {dimension_semantics = [#tpu.dimension_semantics<arbitrary>], iteration_bounds = array<i64: 1>, scalar_prefetch = 0 : i64, scratch_operands = 0 : i64, tpu.core_type = #tpu.core_type<tc>, window_params = [{pipeline_mode = #tpu.pipeline_mode<synchronous>, transform_indices = @transform_0, window_bounds = array<i64: 128, 49>}, {pipeline_mode = #tpu.pipeline_mode<synchronous>, transform_indices = @transform_1, window_bounds = array<i64: 32, 384>}, {pipeline_mode = #tpu.pipeline_mode<synchronous>, transform_indices = @transform_2, window_bounds = array<i64: 32, 49>}]} {
    %c0 = arith.constant 0 : index
    %c0_0 = arith.constant 0 : index
    %0 = vector.load %arg1[%c0, %c0_0] : memref<128x49xf32, #tpu.memory_space<vmem>>, vector<128x49xf32>
    %1 = tpu.iota {dimensions = array<i32: 1>} : vector<1x49xi32>
    %c9363_i32 = arith.constant 9363 : i32
    %2 = vector.broadcast %c9363_i32 : i32 to vector<1x49xi32>
    %3 = arith.muli %1, %2 : vector<1x49xi32>
    %c16_i32 = arith.constant 16 : i32
    %4 = vector.broadcast %c16_i32 : i32 to vector<1x49xi32>
    %5 = arith.shrsi %3, %4 : vector<1x49xi32>
    %c7_i32 = arith.constant 7 : i32
    %6 = vector.broadcast %c7_i32 : i32 to vector<1x49xi32>
    %7 = arith.muli %6, %5 : vector<1x49xi32>
    %8 = arith.subi %1, %7 : vector<1x49xi32>
    %c1_i32 = arith.constant 1 : i32
    %9 = vector.broadcast %c1_i32 : i32 to vector<1x49xi32>
    %10 = arith.cmpi sge, %8, %9 : vector<1x49xi32>
    %11 = vector.extract_strided_slice %0 {offsets = [0, 48], sizes = [128, 1], strides = [1, 1]} : vector<128x49xf32> to vector<128x1xf32>
    %12 = vector.extract_strided_slice %0 {offsets = [0, 0], sizes = [128, 48], strides = [1, 1]} : vector<128x49xf32> to vector<128x48xf32>
    %13 = tpu.concatenate %11, %12 in 1 : vector<128x1xf32>, vector<128x48xf32> -> vector<128x49xf32>
    %14 = vector.extract_strided_slice %0 {offsets = [0, 6], sizes = [128, 43], strides = [1, 1]} : vector<128x49xf32> to vector<128x43xf32>
    %15 = vector.extract_strided_slice %0 {offsets = [0, 0], sizes = [128, 6], strides = [1, 1]} : vector<128x49xf32> to vector<128x6xf32>
    %16 = tpu.concatenate %14, %15 in 1 : vector<128x43xf32>, vector<128x6xf32> -> vector<128x49xf32>
    %17 = vector.shape_cast %10 : vector<1x49xi1> to vector<1x49xi1>
    %18 = vector.broadcast %17 : vector<1x49xi1> to vector<128x49xi1>
    %19 = arith.select %18, %13, %16 : vector<128x49xi1>, vector<128x49xf32>
    %c0_i32 = arith.constant 0 : i32
    %20 = vector.broadcast %c0_i32 : i32 to vector<1x49xi32>
    %21 = arith.cmpi eq, %8, %20 : vector<1x49xi32>
    %22 = vector.extract_strided_slice %19 {offsets = [0, 48], sizes = [128, 1], strides = [1, 1]} : vector<128x49xf32> to vector<128x1xf32>
    %23 = vector.extract_strided_slice %19 {offsets = [0, 0], sizes = [128, 48], strides = [1, 1]} : vector<128x49xf32> to vector<128x48xf32>
    %24 = tpu.concatenate %22, %23 in 1 : vector<128x1xf32>, vector<128x48xf32> -> vector<128x49xf32>
    %cst = arith.constant 0.000000e+00 : f32
    %25 = vector.shape_cast %21 : vector<1x49xi1> to vector<1x49xi1>
    %26 = vector.broadcast %25 : vector<1x49xi1> to vector<128x49xi1>
    %27 = vector.broadcast %cst : f32 to vector<128x49xf32>
    %28 = arith.select %26, %27, %24 : vector<128x49xi1>, vector<128x49xf32>
    %c6_i32 = arith.constant 6 : i32
    %29 = vector.broadcast %c6_i32 : i32 to vector<1x49xi32>
    %30 = arith.cmpi eq, %8, %29 : vector<1x49xi32>
    %31 = vector.extract_strided_slice %19 {offsets = [0, 1], sizes = [128, 48], strides = [1, 1]} : vector<128x49xf32> to vector<128x48xf32>
    %32 = vector.extract_strided_slice %19 {offsets = [0, 0], sizes = [128, 1], strides = [1, 1]} : vector<128x49xf32> to vector<128x1xf32>
    %33 = tpu.concatenate %31, %32 in 1 : vector<128x48xf32>, vector<128x1xf32> -> vector<128x49xf32>
    %cst_1 = arith.constant 0.000000e+00 : f32
    %34 = vector.shape_cast %30 : vector<1x49xi1> to vector<1x49xi1>
    %35 = vector.broadcast %34 : vector<1x49xi1> to vector<128x49xi1>
    %36 = vector.broadcast %cst_1 : f32 to vector<128x49xf32>
    %37 = arith.select %35, %36, %33 : vector<128x49xi1>, vector<128x49xf32>
    %c0_2 = arith.constant 0 : index
    %c0_3 = arith.constant 0 : index
    %38 = vector.load %arg2[%c0_2, %c0_3] : memref<32x384xf32, #tpu.memory_space<vmem>>, vector<32x128xf32>
    %cst_4 = arith.constant dense<0.000000e+00> : vector<32x49xf32>
    %39 = tpu.matmul %38, %28, %cst_4 {dimension_numbers = #tpu.dot_dimension_numbers<[1], [0], [0], [1], [0, 0, 1, 1], [], []>} : vector<32x128xf32>, vector<128x49xf32>, vector<32x49xf32> -> vector<32x49xf32>
    %c0_5 = arith.constant 0 : index
    %c128 = arith.constant 128 : index
    %40 = vector.load %arg2[%c0_5, %c128] : memref<32x384xf32, #tpu.memory_space<vmem>>, vector<32x128xf32>
    %cst_6 = arith.constant dense<0.000000e+00> : vector<32x49xf32>
    %41 = tpu.matmul %40, %19, %cst_6 {dimension_numbers = #tpu.dot_dimension_numbers<[1], [0], [0], [1], [0, 0, 1, 1], [], []>} : vector<32x128xf32>, vector<128x49xf32>, vector<32x49xf32> -> vector<32x49xf32>
    %42 = arith.addf %39, %41 : vector<32x49xf32>
    %c0_7 = arith.constant 0 : index
    %c256 = arith.constant 256 : index
    %43 = vector.load %arg2[%c0_7, %c256] : memref<32x384xf32, #tpu.memory_space<vmem>>, vector<32x128xf32>
    %cst_8 = arith.constant dense<0.000000e+00> : vector<32x49xf32>
    %44 = tpu.matmul %43, %37, %cst_8 {dimension_numbers = #tpu.dot_dimension_numbers<[1], [0], [0], [1], [0, 0, 1, 1], [], []>} : vector<32x128xf32>, vector<128x49xf32>, vector<32x49xf32> -> vector<32x49xf32>
    %45 = arith.addf %42, %44 : vector<32x49xf32>
    %46 = vector.extract_strided_slice %45 {offsets = [0, 42], sizes = [32, 7], strides = [1, 1]} : vector<32x49xf32> to vector<32x7xf32>
    %47 = vector.extract_strided_slice %45 {offsets = [0, 0], sizes = [32, 42], strides = [1, 1]} : vector<32x49xf32> to vector<32x42xf32>
    %48 = tpu.concatenate %46, %47 in 1 : vector<32x7xf32>, vector<32x42xf32> -> vector<32x49xf32>
    %c0_9 = arith.constant 0 : index
    %c0_10 = arith.constant 0 : index
    %49 = vector.load %arg3[%c0_9, %c0_10] : memref<32x49xf32, #tpu.memory_space<vmem>>, vector<32x49xf32>
    tpu.vector_store %arg3[%c0_9, %c0_10], %48 {strides = array<i32>} : memref<32x49xf32, #tpu.memory_space<vmem>>, vector<32x49xf32>,
    return
  }
  func.func @transform_0(%arg0: i32) -> (i32, i32) {
    %c0_i32 = arith.constant 0 : i32
    %c0_i32_0 = arith.constant 0 : i32
    %c0_i32_1 = arith.constant 0 : i32
    return %c0_i32, %c0_i32_0 : i32, i32
  }
  func.func @transform_1(%arg0: i32) -> (i32, i32) {
    %c0_i32 = arith.constant 0 : i32
    %c0_i32_0 = arith.constant 0 : i32
    %c0_i32_1 = arith.constant 0 : i32
    return %c0_i32, %c0_i32_0 : i32, i32
  }
  func.func @transform_2(%arg0: i32) -> (i32, i32) {
    %c0_i32 = arith.constant 0 : i32
    %c0_i32_0 = arith.constant 0 : i32
    %c0_i32_1 = arith.constant 0 : i32
    return %c0_i32, %c0_i32_0 : i32, i32
  }
}

</mosaic_0001>

<llo_original>
// kernel: kernel_generated_3_forward.1
$region0: #{kernel_generated_3_forward.1}
  #allocation0 [shape = 'u32[]', space=smem, size = 0x4, offset = 0x4, fixed_abs, tag = 'smem constant byte address 0x4 - core index']
  #allocation1 [shape = 'u32[144,128]{1,0:T(1,128)}', space=vmem, size = 0x12000, scoped, tag = 'internal scratch']
  %s0 = inlined_call_operand.vmem [shape: f32[128,49], index: 0, kind: input, shape index: {}]
  %s1 = inlined_call_operand.vmem [shape: f32[32,384], index: 1, kind: input, shape index: {}]
  %s2 = inlined_call_operand.vmem [shape: f32[32,49], index: 2, kind: output, shape index: {}]
  %s3 = sld [smem:[#allocation0]]
  $region18: #{kernel_generated_3_forward.1} parent=0
    _
  %s5 = ssub.s32 1, %s3
  %s6 = scalar_select 0, %s5, %s3
  // Predicated region
  $region2: #{kernel_generated_3_forward.1} parent=0 // pred_check
    _
  $region3: #{kernel_generated_3_forward.1} parent=0 // pred_check_branch
    %8 = sbr.rel (0) target = $region5
  $region4: #{kernel_generated_3_forward.1} parent=0 // pred_region
    _
  $region5: #{kernel_generated_3_forward.1} parent=0 // pred_fallthru
    _
  // Predicated region
  $region6: #{kernel_generated_3_forward.1} parent=0 // pred_check
    _
  $region7: #{kernel_generated_3_forward.1} parent=0 // pred_check_branch
    %10 = sbr.rel (0) target = $region9
  $region8: #{kernel_generated_3_forward.1} parent=0 // pred_region
    _
  $region9: #{kernel_generated_3_forward.1} parent=0 // pred_fallthru
    _
  %v11 = vld [vmem:[%s0] sm:$0xff]
  %v12 = vld [vmem:[%s0 + $0x8] sm:$0xff]
  %v13 = vld [vmem:[%s0 + $0x10] sm:$0xff]
  %v14 = vld [vmem:[%s0 + $0x18] sm:$0xff]
  %v15 = vld [vmem:[%s0 + $0x20] sm:$0xff]
  %v16 = vld [vmem:[%s0 + $0x28] sm:$0xff]
  %v17 = vld [vmem:[%s0 + $0x30] sm:$0xff]
  %v18 = vld [vmem:[%s0 + $0x38] sm:$0xff]
  %v19 = vld [vmem:[%s0 + $0x40] sm:$0xff]
  %v20 = vld [vmem:[%s0 + $0x48] sm:$0xff]
  %v21 = vld [vmem:[%s0 + $0x50] sm:$0xff]
  %v22 = vld [vmem:[%s0 + $0x58] sm:$0xff]
  %v23 = vld [vmem:[%s0 + $0x60] sm:$0xff]
  %v24 = vld [vmem:[%s0 + $0x68] sm:$0xff]
  %v25 = vld [vmem:[%s0 + $0x70] sm:$0xff]
  %v26 = vld [vmem:[%s0 + $0x78] sm:$0xff]
  %v27 = vlaneseq
  %v28 = vand.u32 %v27, 127
  %v29 = vmul.u32 %v28, 9363
  %v30 = vshra.s32 %v29, 16
  %v31 = vmul.u32 %v30, 7
  %v32 = vsub.s32 %v28, %v31
  %vm33 = vcmp.ge.s32.totalorder %v32, 1
  %50 = vrot.lane.b32.xlu0 %v11, 80
  %v51 = vpop.permute.xlu0 %50
  %52 = vrot.lane.b32.xlu0 %v12, 80
  %v53 = vpop.permute.xlu0 %52
  %54 = vrot.lane.b32.xlu0 %v13, 80
  %v55 = vpop.permute.xlu0 %54
  %56 = vrot.lane.b32.xlu0 %v14, 80
  %v57 = vpop.permute.xlu0 %56
  %58 = vrot.lane.b32.xlu0 %v15, 80
  %v59 = vpop.permute.xlu0 %58
  %60 = vrot.lane.b32.xlu0 %v16, 80
  %v61 = vpop.permute.xlu0 %60
  %62 = vrot.lane.b32.xlu0 %v17, 80
  %v63 = vpop.permute.xlu0 %62
  %64 = vrot.lane.b32.xlu0 %v18, 80
  %v65 = vpop.permute.xlu0 %64
  %66 = vrot.lane.b32.xlu0 %v19, 80
  %v67 = vpop.permute.xlu0 %66
  %68 = vrot.lane.b32.xlu0 %v20, 80
  %v69 = vpop.permute.xlu0 %68
  %70 = vrot.lane.b32.xlu0 %v21, 80
  %v71 = vpop.permute.xlu0 %70
  %72 = vrot.lane.b32.xlu0 %v22, 80
  %v73 = vpop.permute.xlu0 %72
  %74 = vrot.lane.b32.xlu0 %v23, 80
  %v75 = vpop.permute.xlu0 %74
  %76 = vrot.lane.b32.xlu0 %v24, 80
  %v77 = vpop.permute.xlu0 %76
  %78 = vrot.lane.b32.xlu0 %v25, 80
  %v79 = vpop.permute.xlu0 %78
  %80 = vrot.lane.b32.xlu0 %v26, 80
  %v81 = vpop.permute.xlu0 %80
  %98 = vrot.lane.b32.xlu0 %v11, 1
  %v99 = vpop.permute.xlu0 %98
  %100 = vrot.lane.b32.xlu0 %v12, 1
  %v101 = vpop.permute.xlu0 %100
  %102 = vrot.lane.b32.xlu0 %v13, 1
  %v103 = vpop.permute.xlu0 %102
  %104 = vrot.lane.b32.xlu0 %v14, 1
  %v105 = vpop.permute.xlu0 %104
  %106 = vrot.lane.b32.xlu0 %v15, 1
  %v107 = vpop.permute.xlu0 %106
  %108 = vrot.lane.b32.xlu0 %v16, 1
  %v109 = vpop.permute.xlu0 %108
  %110 = vrot.lane.b32.xlu0 %v17, 1
  %v111 = vpop.permute.xlu0 %110
  %112 = vrot.lane.b32.xlu0 %v18, 1
  %v113 = vpop.permute.xlu0 %112
  %114 = vrot.lane.b32.xlu0 %v19, 1
  %v115 = vpop.permute.xlu0 %114
  %116 = vrot.lane.b32.xlu0 %v20, 1
  %v117 = vpop.permute.xlu0 %116
  %118 = vrot.lane.b32.xlu0 %v21, 1
  %v119 = vpop.permute.xlu0 %118
  %120 = vrot.lane.b32.xlu0 %v22, 1
  %v121 = vpop.permute.xlu0 %120
  %122 = vrot.lane.b32.xlu0 %v23, 1
  %v123 = vpop.permute.xlu0 %122
  %124 = vrot.lane.b32.xlu0 %v24, 1
  %v125 = vpop.permute.xlu0 %124
  %126 = vrot.lane.b32.xlu0 %v25, 1
  %v127 = vpop.permute.xlu0 %126
  %128 = vrot.lane.b32.xlu0 %v26, 1
  %v129 = vpop.permute.xlu0 %128
  %vm146 = vcmask 7168
  %v147 = vsel %vm146, %v51, %v99
  %v148 = vsel %vm146, %v53, %v101
  %v149 = vsel %vm146, %v55, %v103
  %v150 = vsel %vm146, %v57, %v105
  %v151 = vsel %vm146, %v59, %v107
  %v152 = vsel %vm146, %v61, %v109
  %v153 = vsel %vm146, %v63, %v111
  %v154 = vsel %vm146, %v65, %v113
  %v155 = vsel %vm146, %v67, %v115
  %v156 = vsel %vm146, %v69, %v117
  %v157 = vsel %vm146, %v71, %v119
  %v158 = vsel %vm146, %v73, %v121
  %v159 = vsel %vm146, %v75, %v123
  %v160 = vsel %vm146, %v77, %v125
  %v161 = vsel %vm146, %v79, %v127
  %v162 = vsel %vm146, %v81, %v129
  %163 = vrot.lane.b32.xlu0 %v11, 122
  %v164 = vpop.permute.xlu0 %163
  %165 = vrot.lane.b32.xlu0 %v12, 122
  %v166 = vpop.permute.xlu0 %165
  %167 = vrot.lane.b32.xlu0 %v13, 122
  %v168 = vpop.permute.xlu0 %167
  %169 = vrot.lane.b32.xlu0 %v14, 122
  %v170 = vpop.permute.xlu0 %169
  %171 = vrot.lane.b32.xlu0 %v15, 122
  %v172 = vpop.permute.xlu0 %171
  %173 = vrot.lane.b32.xlu0 %v16, 122
  %v174 = vpop.permute.xlu0 %173
  %175 = vrot.lane.b32.xlu0 %v17, 122
  %v176 = vpop.permute.xlu0 %175
  %177 = vrot.lane.b32.xlu0 %v18, 122
  %v178 = vpop.permute.xlu0 %177
  %179 = vrot.lane.b32.xlu0 %v19, 122
  %v180 = vpop.permute.xlu0 %179
  %181 = vrot.lane.b32.xlu0 %v20, 122
  %v182 = vpop.permute.xlu0 %181
  %183 = vrot.lane.b32.xlu0 %v21, 122
  %v184 = vpop.permute.xlu0 %183
  %185 = vrot.lane.b32.xlu0 %v22, 122
  %v186 = vpop.permute.xlu0 %185
  %187 = vrot.lane.b32.xlu0 %v23, 122
  %v188 = vpop.permute.xlu0 %187
  %189 = vrot.lane.b32.xlu0 %v24, 122
  %v190 = vpop.permute.xlu0 %189
  %191 = vrot.lane.b32.xlu0 %v25, 122
  %v192 = vpop.permute.xlu0 %191
  %193 = vrot.lane.b32.xlu0 %v26, 122
  %v194 = vpop.permute.xlu0 %193
  %211 = vrot.lane.b32.xlu0 %v11, 43
  %v212 = vpop.permute.xlu0 %211
  %213 = vrot.lane.b32.xlu0 %v12, 43
  %v214 = vpop.permute.xlu0 %213
  %215 = vrot.lane.b32.xlu0 %v13, 43
  %v216 = vpop.permute.xlu0 %215
  %217 = vrot.lane.b32.xlu0 %v14, 43
  %v218 = vpop.permute.xlu0 %217
  %219 = vrot.lane.b32.xlu0 %v15, 43
  %v220 = vpop.permute.xlu0 %219
  %221 = vrot.lane.b32.xlu0 %v16, 43
  %v222 = vpop.permute.xlu0 %221
  %223 = vrot.lane.b32.xlu0 %v17, 43
  %v224 = vpop.permute.xlu0 %223
  %225 = vrot.lane.b32.xlu0 %v18, 43
  %v226 = vpop.permute.xlu0 %225
  %227 = vrot.lane.b32.xlu0 %v19, 43
  %v228 = vpop.permute.xlu0 %227
  %229 = vrot.lane.b32.xlu0 %v20, 43
  %v230 = vpop.permute.xlu0 %229
  %231 = vrot.lane.b32.xlu0 %v21, 43
  %v232 = vpop.permute.xlu0 %231
  %233 = vrot.lane.b32.xlu0 %v22, 43
  %v234 = vpop.permute.xlu0 %233
  %235 = vrot.lane.b32.xlu0 %v23, 43
  %v236 = vpop.permute.xlu0 %235
  %237 = vrot.lane.b32.xlu0 %v24, 43
  %v238 = vpop.permute.xlu0 %237
  %239 = vrot.lane.b32.xlu0 %v25, 43
  %v240 = vpop.permute.xlu0 %239
  %241 = vrot.lane.b32.xlu0 %v26, 43
  %v242 = vpop.permute.xlu0 %241
  %vm259 = vcmask 351232
  %v260 = vsel %vm259, %v164, %v212
  %v261 = vsel %vm259, %v166, %v214
  %v262 = vsel %vm259, %v168, %v216
  %v263 = vsel %vm259, %v170, %v218
  %v264 = vsel %vm259, %v172, %v220
  %v265 = vsel %vm259, %v174, %v222
  %v266 = vsel %vm259, %v176, %v224
  %v267 = vsel %vm259, %v178, %v226
  %v268 = vsel %vm259, %v180, %v228
  %v269 = vsel %vm259, %v182, %v230
  %v270 = vsel %vm259, %v184, %v232
  %v271 = vsel %vm259, %v186, %v234
  %v272 = vsel %vm259, %v188, %v236
  %v273 = vsel %vm259, %v190, %v238
  %v274 = vsel %vm259, %v192, %v240
  %v275 = vsel %vm259, %v194, %v242
  %v276 = vsel %vm33, 1, 0
  %vm277 = vcmp.eq.s32.totalorder %v276, 1
  %v278 = vsel %vm277, %v147, %v260
  %v279 = vsel %vm277, %v148, %v261
  %v280 = vsel %vm277, %v149, %v262
  %v281 = vsel %vm277, %v150, %v263
  %v282 = vsel %vm277, %v151, %v264
  %v283 = vsel %vm277, %v152, %v265
  %v284 = vsel %vm277, %v153, %v266
  %v285 = vsel %vm277, %v154, %v267
  %v286 = vsel %vm277, %v155, %v268
  %v287 = vsel %vm277, %v156, %v269
  %v288 = vsel %vm277, %v157, %v270
  %v289 = vsel %vm277, %v158, %v271
  %v290 = vsel %vm277, %v159, %v272
  %v291 = vsel %vm277, %v160, %v273
  %v292 = vsel %vm277, %v161, %v274
  %v293 = vsel %vm277, %v162, %v275
  %vm294 = vcmp.eq.s32.totalorder %v32, 0
  %311 = vrot.lane.b32.xlu0 %v278, 80
  %v312 = vpop.permute.xlu0 %311
  %313 = vrot.lane.b32.xlu0 %v279, 80
  %v314 = vpop.permute.xlu0 %313
  %315 = vrot.lane.b32.xlu0 %v280, 80
  %v316 = vpop.permute.xlu0 %315
  %317 = vrot.lane.b32.xlu0 %v281, 80
  %v318 = vpop.permute.xlu0 %317
  %319 = vrot.lane.b32.xlu0 %v282, 80
  %v320 = vpop.permute.xlu0 %319
  %321 = vrot.lane.b32.xlu0 %v283, 80
  %v322 = vpop.permute.xlu0 %321
  %323 = vrot.lane.b32.xlu0 %v284, 80
  %v324 = vpop.permute.xlu0 %323
  %325 = vrot.lane.b32.xlu0 %v285, 80
  %v326 = vpop.permute.xlu0 %325
  %327 = vrot.lane.b32.xlu0 %v286, 80
  %v328 = vpop.permute.xlu0 %327
  %329 = vrot.lane.b32.xlu0 %v287, 80
  %v330 = vpop.permute.xlu0 %329
  %331 = vrot.lane.b32.xlu0 %v288, 80
  %v332 = vpop.permute.xlu0 %331
  %333 = vrot.lane.b32.xlu0 %v289, 80
  %v334 = vpop.permute.xlu0 %333
  %335 = vrot.lane.b32.xlu0 %v290, 80
  %v336 = vpop.permute.xlu0 %335
  %337 = vrot.lane.b32.xlu0 %v291, 80
  %v338 = vpop.permute.xlu0 %337
  %339 = vrot.lane.b32.xlu0 %v292, 80
  %v340 = vpop.permute.xlu0 %339
  %341 = vrot.lane.b32.xlu0 %v293, 80
  %v342 = vpop.permute.xlu0 %341
  %359 = vrot.lane.b32.xlu0 %v278, 1
  %v360 = vpop.permute.xlu0 %359
  %361 = vrot.lane.b32.xlu0 %v279, 1
  %v362 = vpop.permute.xlu0 %361
  %363 = vrot.lane.b32.xlu0 %v280, 1
  %v364 = vpop.permute.xlu0 %363
  %365 = vrot.lane.b32.xlu0 %v281, 1
  %v366 = vpop.permute.xlu0 %365
  %367 = vrot.lane.b32.xlu0 %v282, 1
  %v368 = vpop.permute.xlu0 %367
  %369 = vrot.lane.b32.xlu0 %v283, 1
  %v370 = vpop.permute.xlu0 %369
  %371 = vrot.lane.b32.xlu0 %v284, 1
  %v372 = vpop.permute.xlu0 %371
  %373 = vrot.lane.b32.xlu0 %v285, 1
  %v374 = vpop.permute.xlu0 %373
  %375 = vrot.lane.b32.xlu0 %v286, 1
  %v376 = vpop.permute.xlu0 %375
  %377 = vrot.lane.b32.xlu0 %v287, 1
  %v378 = vpop.permute.xlu0 %377
  %379 = vrot.lane.b32.xlu0 %v288, 1
  %v380 = vpop.permute.xlu0 %379
  %381 = vrot.lane.b32.xlu0 %v289, 1
  %v382 = vpop.permute.xlu0 %381
  %383 = vrot.lane.b32.xlu0 %v290, 1
  %v384 = vpop.permute.xlu0 %383
  %385 = vrot.lane.b32.xlu0 %v291, 1
  %v386 = vpop.permute.xlu0 %385
  %387 = vrot.lane.b32.xlu0 %v292, 1
  %v388 = vpop.permute.xlu0 %387
  %389 = vrot.lane.b32.xlu0 %v293, 1
  %v390 = vpop.permute.xlu0 %389
  %v407 = vsel %vm146, %v312, %v360
  %v408 = vsel %vm146, %v314, %v362
  %v409 = vsel %vm146, %v316, %v364
  %v410 = vsel %vm146, %v318, %v366
  %v411 = vsel %vm146, %v320, %v368
  %v412 = vsel %vm146, %v322, %v370
  %v413 = vsel %vm146, %v324, %v372
  %v414 = vsel %vm146, %v326, %v374
  %v415 = vsel %vm146, %v328, %v376
  %v416 = vsel %vm146, %v330, %v378
  %v417 = vsel %vm146, %v332, %v380
  %v418 = vsel %vm146, %v334, %v382
  %v419 = vsel %vm146, %v336, %v384
  %v420 = vsel %vm146, %v338, %v386
  %v421 = vsel %vm146, %v340, %v388
  %v422 = vsel %vm146, %v342, %v390
  %v423 = vsel %vm294, 1, 0
  %vm424 = vcmp.eq.s32.totalorder %v423, 1
  %v425 = vsel %vm424, 0.0, %v407
  %v426 = vsel %vm424, 0.0, %v408
  %v427 = vsel %vm424, 0.0, %v409
  %v428 = vsel %vm424, 0.0, %v410
  %v429 = vsel %vm424, 0.0, %v411
  %v430 = vsel %vm424, 0.0, %v412
  %v431 = vsel %vm424, 0.0, %v413
  %v432 = vsel %vm424, 0.0, %v414
  %v433 = vsel %vm424, 0.0, %v415
  %v434 = vsel %vm424, 0.0, %v416
  %v435 = vsel %vm424, 0.0, %v417
  %v436 = vsel %vm424, 0.0, %v418
  %v437 = vsel %vm424, 0.0, %v419
  %v438 = vsel %vm424, 0.0, %v420
  %v439 = vsel %vm424, 0.0, %v421
  %v440 = vsel %vm424, 0.0, %v422
  %vm441 = vcmp.eq.s32.totalorder %v32, 6
  %442 = vrot.lane.b32.xlu0 %v278, 127
  %v443 = vpop.permute.xlu0 %442
  %444 = vrot.lane.b32.xlu0 %v279, 127
  %v445 = vpop.permute.xlu0 %444
  %446 = vrot.lane.b32.xlu0 %v280, 127
  %v447 = vpop.permute.xlu0 %446
  %448 = vrot.lane.b32.xlu0 %v281, 127
  %v449 = vpop.permute.xlu0 %448
  %450 = vrot.lane.b32.xlu0 %v282, 127
  %v451 = vpop.permute.xlu0 %450
  %452 = vrot.lane.b32.xlu0 %v283, 127
  %v453 = vpop.permute.xlu0 %452
  %454 = vrot.lane.b32.xlu0 %v284, 127
  %v455 = vpop.permute.xlu0 %454
  %456 = vrot.lane.b32.xlu0 %v285, 127
  %v457 = vpop.permute.xlu0 %456
  %458 = vrot.lane.b32.xlu0 %v286, 127
  %v459 = vpop.permute.xlu0 %458
  %460 = vrot.lane.b32.xlu0 %v287, 127
  %v461 = vpop.permute.xlu0 %460
  %462 = vrot.lane.b32.xlu0 %v288, 127
  %v463 = vpop.permute.xlu0 %462
  %464 = vrot.lane.b32.xlu0 %v289, 127
  %v465 = vpop.permute.xlu0 %464
  %466 = vrot.lane.b32.xlu0 %v290, 127
  %v467 = vpop.permute.xlu0 %466
  %468 = vrot.lane.b32.xlu0 %v291, 127
  %v469 = vpop.permute.xlu0 %468
  %470 = vrot.lane.b32.xlu0 %v292, 127
  %v471 = vpop.permute.xlu0 %470
  %472 = vrot.lane.b32.xlu0 %v293, 127
  %v473 = vpop.permute.xlu0 %472
  %490 = vrot.lane.b32.xlu0 %v278, 48
  %v491 = vpop.permute.xlu0 %490
  %492 = vrot.lane.b32.xlu0 %v279, 48
  %v493 = vpop.permute.xlu0 %492
  %494 = vrot.lane.b32.xlu0 %v280, 48
  %v495 = vpop.permute.xlu0 %494
  %496 = vrot.lane.b32.xlu0 %v281, 48
  %v497 = vpop.permute.xlu0 %496
  %498 = vrot.lane.b32.xlu0 %v282, 48
  %v499 = vpop.permute.xlu0 %498
  %500 = vrot.lane.b32.xlu0 %v283, 48
  %v501 = vpop.permute.xlu0 %500
  %502 = vrot.lane.b32.xlu0 %v284, 48
  %v503 = vpop.permute.xlu0 %502
  %504 = vrot.lane.b32.xlu0 %v285, 48
  %v505 = vpop.permute.xlu0 %504
  %506 = vrot.lane.b32.xlu0 %v286, 48
  %v507 = vpop.permute.xlu0 %506
  %508 = vrot.lane.b32.xlu0 %v287, 48
  %v509 = vpop.permute.xlu0 %508
  %510 = vrot.lane.b32.xlu0 %v288, 48
  %v511 = vpop.permute.xlu0 %510
  %512 = vrot.lane.b32.xlu0 %v289, 48
  %v513 = vpop.permute.xlu0 %512
  %514 = vrot.lane.b32.xlu0 %v290, 48
  %v515 = vpop.permute.xlu0 %514
  %516 = vrot.lane.b32.xlu0 %v291, 48
  %v517 = vpop.permute.xlu0 %516
  %518 = vrot.lane.b32.xlu0 %v292, 48
  %v519 = vpop.permute.xlu0 %518
  %520 = vrot.lane.b32.xlu0 %v293, 48
  %v521 = vpop.permute.xlu0 %520
  %vm538 = vcmask 392192
  %v539 = vsel %vm538, %v443, %v491
  %v540 = vsel %vm538, %v445, %v493
  %v541 = vsel %vm538, %v447, %v495
  %v542 = vsel %vm538, %v449, %v497
  %v543 = vsel %vm538, %v451, %v499
  %v544 = vsel %vm538, %v453, %v501
  %v545 = vsel %vm538, %v455, %v503
  %v546 = vsel %vm538, %v457, %v505
  %v547 = vsel %vm538, %v459, %v507
  %v548 = vsel %vm538, %v461, %v509
  %v549 = vsel %vm538, %v463, %v511
  %v550 = vsel %vm538, %v465, %v513
  %v551 = vsel %vm538, %v467, %v515
  %v552 = vsel %vm538, %v469, %v517
  %v553 = vsel %vm538, %v471, %v519
  %v554 = vsel %vm538, %v473, %v521
  %v555 = vsel %vm441, 1, 0
  %vm556 = vcmp.eq.s32.totalorder %v555, 1
  %v557 = vsel %vm556, 0.0, %v539
  %v558 = vsel %vm556, 0.0, %v540
  %v559 = vsel %vm556, 0.0, %v541
  %v560 = vsel %vm556, 0.0, %v542
  %v561 = vsel %vm556, 0.0, %v543
  %v562 = vsel %vm556, 0.0, %v544
  %v563 = vsel %vm556, 0.0, %v545
  %v564 = vsel %vm556, 0.0, %v546
  %v565 = vsel %vm556, 0.0, %v547
  %v566 = vsel %vm556, 0.0, %v548
  %v567 = vsel %vm556, 0.0, %v549
  %v568 = vsel %vm556, 0.0, %v550
  %v569 = vsel %vm556, 0.0, %v551
  %v570 = vsel %vm556, 0.0, %v552
  %v571 = vsel %vm556, 0.0, %v553
  %v572 = vsel %vm556, 0.0, %v554
  %v573 = vld [vmem:[%s1] sm:$0xff]
  %v574 = vld [vmem:[%s1 + $0x18] sm:$0xff]
  %v575 = vld [vmem:[%s1 + $0x30] sm:$0xff]
  %v576 = vld [vmem:[%s1 + $0x48] sm:$0xff]
  %v577 = vld [vmem:[%s1 + $0x8] sm:$0xff]
  %v578 = vld [vmem:[%s1 + $0x20] sm:$0xff]
  %v579 = vld [vmem:[%s1 + $0x38] sm:$0xff]
  %v580 = vld [vmem:[%s1 + $0x50] sm:$0xff]
  %581 = vmatprep.subr.mxu0 0.0
  %582 = vmatpush1.msra.mxu0 %v293
  %583 = vmatprep.subr.mxu0 0.0
  %584 = vmatpush1.msra.mxu0 %v292
  %585 = vmatprep.subr.mxu0 0.0
  %586 = vmatpush1.msra.mxu0 %v291
  %587 = vmatprep.subr.mxu0 0.0
  %588 = vmatpush1.msra.mxu0 %v290
  %589 = vmatprep.subr.mxu0 0.0
  %590 = vmatpush1.msra.mxu0 %v289
  %591 = vmatprep.subr.mxu0 0.0
  %592 = vmatpush1.msra.mxu0 %v288
  %593 = vmatprep.subr.mxu0 0.0
  %594 = vmatpush1.msra.mxu0 %v287
  %595 = vmatprep.subr.mxu0 0.0
  %596 = vmatpush1.msra.mxu0 %v286
  %597 = vmatprep.subr.mxu0 0.0
  %598 = vmatpush1.msra.mxu0 %v285
  %599 = vmatprep.subr.mxu0 0.0
  %600 = vmatpush1.msra.mxu0 %v284
  %601 = vmatprep.subr.mxu0 0.0
  %602 = vmatpush1.msra.mxu0 %v283
  %603 = vmatprep.subr.mxu0 0.0
  %604 = vmatpush1.msra.mxu0 %v282
  %605 = vmatprep.subr.mxu0 0.0
  %606 = vmatpush1.msra.mxu0 %v281
  %607 = vmatprep.subr.mxu0 0.0
  %608 = vmatpush1.msra.mxu0 %v280
  %609 = vmatprep.subr.mxu0 0.0
  %610 = vmatpush1.msra.mxu0 %v279
  %611 = vmatprep.subr.mxu0 0.0
  %612 = vmatpush1.msra.mxu0 %v278
  %613 = vmatprep.subr.mxu0 0.0
  %614 = vmatpush2.msra.mxu0 0.0
  %615 = vmatprep.subr.mxu0 0.0
  %616 = vmatpush2.msra.mxu0 0.0
  %617 = vmatprep.subr.mxu0 0.0
  %618 = vmatpush2.msra.mxu0 0.0
  %619 = vmatprep.subr.mxu0 0.0
  %620 = vmatpush2.msra.mxu0 0.0
  %621 = vmatprep.subr.mxu0 0.0
  %622 = vmatpush2.msra.mxu0 0.0
  %623 = vmatprep.subr.mxu0 0.0
  %624 = vmatpush2.msra.mxu0 0.0
  %625 = vmatprep.subr.mxu0 0.0
  %626 = vmatpush2.msra.mxu0 0.0
  %627 = vmatprep.subr.mxu0 0.0
  %628 = vmatpush2.msra.mxu0 0.0
  %629 = vmatprep.subr.mxu0 0.0
  %630 = vmatpush2.msra.mxu0 0.0
  %631 = vmatprep.subr.mxu0 0.0
  %632 = vmatpush2.msra.mxu0 0.0
  %633 = vmatprep.subr.mxu0 0.0
  %634 = vmatpush2.msra.mxu0 0.0
  %635 = vmatprep.subr.mxu0 0.0
  %636 = vmatpush2.msra.mxu0 0.0
  %637 = vmatprep.subr.mxu0 0.0
  %638 = vmatpush2.msra.mxu0 0.0
  %639 = vmatprep.subr.mxu0 0.0
  %640 = vmatpush2.msra.mxu0 0.0
  %641 = vmatprep.subr.mxu0 0.0
  %642 = vmatpush2.msra.mxu0 0.0
  %643 = vmatprep.subr.mxu0 0.0
  %644 = vmatpush2.msra.mxu0 0.0
  %645 = vmatprep.mubr.f32.mxu0 0.0
  %646 = vmatmul.mubr.f32.gmra.mxu0 %v577
  %v647 = vpop.f32.mrf.mxu0
  %v648 = vadd.f32 0.0, %v647
  %v649 = vpop.f32.mrf.mxu0
  %650 = vmatprep.mubr.f32.mxu0 0.0
  %651 = vmatmul.mubr.f32.gmra.mxu0 %v578
  %v652 = vpop.f32.mrf.mxu0
  %v653 = vadd.f32 0.0, %v652
  %v654 = vpop.f32.mrf.mxu0
  %655 = vmatprep.mubr.f32.mxu0 0.0
  %656 = vmatmul.mubr.f32.gmra.mxu0 %v579
  %v657 = vpop.f32.mrf.mxu0
  %v658 = vadd.f32 0.0, %v657
  %v659 = vpop.f32.mrf.mxu0
  %660 = vmatprep.mubr.f32.mxu0 0.0
  %661 = vmatmul.mubr.f32.gmra.mxu0 %v580
  %v662 = vpop.f32.mrf.mxu0
  %v663 = vadd.f32 0.0, %v662
  %v664 = vpop.f32.mrf.mxu0
  %665 = vdwg.mxu0
  %666 = vmatprep.subr.mxu0 0.0
  %667 = vmatpush1.msra.mxu0 %v440
  %668 = vmatprep.subr.mxu0 0.0
  %669 = vmatpush1.msra.mxu0 %v439
  %670 = vmatprep.subr.mxu0 0.0
  %671 = vmatpush1.msra.mxu0 %v438
  %672 = vmatprep.subr.mxu0 0.0
  %673 = vmatpush1.msra.mxu0 %v437
  %674 = vmatprep.subr.mxu0 0.0
  %675 = vmatpush1.msra.mxu0 %v436
  %676 = vmatprep.subr.mxu0 0.0
  %677 = vmatpush1.msra.mxu0 %v435
  %678 = vmatprep.subr.mxu0 0.0
  %679 = vmatpush1.msra.mxu0 %v434
  %680 = vmatprep.subr.mxu0 0.0
  %681 = vmatpush1.msra.mxu0 %v433
  %682 = vmatprep.subr.mxu0 0.0
  %683 = vmatpush1.msra.mxu0 %v432
  %684 = vmatprep.subr.mxu0 0.0
  %685 = vmatpush1.msra.mxu0 %v431
  %686 = vmatprep.subr.mxu0 0.0
  %687 = vmatpush1.msra.mxu0 %v430
  %688 = vmatprep.subr.mxu0 0.0
  %689 = vmatpush1.msra.mxu0 %v429
  %690 = vmatprep.subr.mxu0 0.0
  %691 = vmatpush1.msra.mxu0 %v428
  %692 = vmatprep.subr.mxu0 0.0
  %693 = vmatpush1.msra.mxu0 %v427
  %694 = vmatprep.subr.mxu0 0.0
  %695 = vmatpush1.msra.mxu0 %v426
  %696 = vmatprep.subr.mxu0 0.0
  %697 = vmatpush1.msra.mxu0 %v425
  %698 = vmatprep.subr.mxu0 0.0
  %699 = vmatpush2.msra.mxu0 0.0
  %700 = vmatprep.subr.mxu0 0.0
  %701 = vmatpush2.msra.mxu0 0.0
  %702 = vmatprep.subr.mxu0 0.0
  %703 = vmatpush2.msra.mxu0 0.0
  %704 = vmatprep.subr.mxu0 0.0
  %705 = vmatpush2.msra.mxu0 0.0
  %706 = vmatprep.subr.mxu0 0.0
  %707 = vmatpush2.msra.mxu0 0.0
  %708 = vmatprep.subr.mxu0 0.0
  %709 = vmatpush2.msra.mxu0 0.0
  %710 = vmatprep.subr.mxu0 0.0
  %711 = vmatpush2.msra.mxu0 0.0
  %712 = vmatprep.subr.mxu0 0.0
  %713 = vmatpush2.msra.mxu0 0.0
  %714 = vmatprep.subr.mxu0 0.0
  %715 = vmatpush2.msra.mxu0 0.0
  %716 = vmatprep.subr.mxu0 0.0
  %717 = vmatpush2.msra.mxu0 0.0
  %718 = vmatprep.subr.mxu0 0.0
  %719 = vmatpush2.msra.mxu0 0.0
  %720 = vmatprep.subr.mxu0 0.0
  %721 = vmatpush2.msra.mxu0 0.0
  %722 = vmatprep.subr.mxu0 0.0
  %723 = vmatpush2.msra.mxu0 0.0
  %724 = vmatprep.subr.mxu0 0.0
  %725 = vmatpush2.msra.mxu0 0.0
  %726 = vmatprep.subr.mxu0 0.0
  %727 = vmatpush2.msra.mxu0 0.0
  %728 = vmatprep.subr.mxu0 0.0
  %729 = vmatpush2.msra.mxu0 0.0
  %730 = vmatprep.mubr.f32.mxu0 0.0
  %731 = vmatmul.mubr.f32.gmra.mxu0 %v573
  %v732 = vpop.f32.mrf.mxu0
  %v733 = vadd.f32 %v648, %v732
  %v734 = vpop.f32.mrf.mxu0
  %735 = vmatprep.mubr.f32.mxu0 0.0
  %736 = vmatmul.mubr.f32.gmra.mxu0 %v574
  %v737 = vpop.f32.mrf.mxu0
  %v738 = vadd.f32 %v653, %v737
  %v739 = vpop.f32.mrf.mxu0
  %740 = vmatprep.mubr.f32.mxu0 0.0
  %741 = vmatmul.mubr.f32.gmra.mxu0 %v575
  %v742 = vpop.f32.mrf.mxu0
  %v743 = vadd.f32 %v658, %v742
  %v744 = vpop.f32.mrf.mxu0
  %745 = vmatprep.mubr.f32.mxu0 0.0
  %746 = vmatmul.mubr.f32.gmra.mxu0 %v576
  %v747 = vpop.f32.mrf.mxu0
  %v748 = vadd.f32 %v663, %v747
  %v749 = vpop.f32.mrf.mxu0
  %750 = vdwg.mxu0
  %v751 = vld [vmem:[%s1 + $0x10] sm:$0xff]
  %v752 = vld [vmem:[%s1 + $0x28] sm:$0xff]
  %v753 = vld [vmem:[%s1 + $0x40] sm:$0xff]
  %v754 = vld [vmem:[%s1 + $0x58] sm:$0xff]
  %755 = vmatprep.subr.mxu0 0.0
  %756 = vmatpush1.msra.mxu0 %v572
  %757 = vmatprep.subr.mxu0 0.0
  %758 = vmatpush1.msra.mxu0 %v571
  %759 = vmatprep.subr.mxu0 0.0
  %760 = vmatpush1.msra.mxu0 %v570
  %761 = vmatprep.subr.mxu0 0.0
  %762 = vmatpush1.msra.mxu0 %v569
  %763 = vmatprep.subr.mxu0 0.0
  %764 = vmatpush1.msra.mxu0 %v568
  %765 = vmatprep.subr.mxu0 0.0
  %766 = vmatpush1.msra.mxu0 %v567
  %767 = vmatprep.subr.mxu0 0.0
  %768 = vmatpush1.msra.mxu0 %v566
  %769 = vmatprep.subr.mxu0 0.0
  %770 = vmatpush1.msra.mxu0 %v565
  %771 = vmatprep.subr.mxu0 0.0
  %772 = vmatpush1.msra.mxu0 %v564
  %773 = vmatprep.subr.mxu0 0.0
  %774 = vmatpush1.msra.mxu0 %v563
  %775 = vmatprep.subr.mxu0 0.0
  %776 = vmatpush1.msra.mxu0 %v562
  %777 = vmatprep.subr.mxu0 0.0
  %778 = vmatpush1.msra.mxu0 %v561
  %779 = vmatprep.subr.mxu0 0.0
  %780 = vmatpush1.msra.mxu0 %v560
  %781 = vmatprep.subr.mxu0 0.0
  %782 = vmatpush1.msra.mxu0 %v559
  %783 = vmatprep.subr.mxu0 0.0
  %784 = vmatpush1.msra.mxu0 %v558
  %785 = vmatprep.subr.mxu0 0.0
  %786 = vmatpush1.msra.mxu0 %v557
  %787 = vmatprep.subr.mxu0 0.0
  %788 = vmatpush2.msra.mxu0 0.0
  %789 = vmatprep.subr.mxu0 0.0
  %790 = vmatpush2.msra.mxu0 0.0
  %791 = vmatprep.subr.mxu0 0.0
  %792 = vmatpush2.msra.mxu0 0.0
  %793 = vmatprep.subr.mxu0 0.0
  %794 = vmatpush2.msra.mxu0 0.0
  %795 = vmatprep.subr.mxu0 0.0
  %796 = vmatpush2.msra.mxu0 0.0
  %797 = vmatprep.subr.mxu0 0.0
  %798 = vmatpush2.msra.mxu0 0.0
  %799 = vmatprep.subr.mxu0 0.0
  %800 = vmatpush2.msra.mxu0 0.0
  %801 = vmatprep.subr.mxu0 0.0
  %802 = vmatpush2.msra.mxu0 0.0
  %803 = vmatprep.subr.mxu0 0.0
  %804 = vmatpush2.msra.mxu0 0.0
  %805 = vmatprep.subr.mxu0 0.0
  %806 = vmatpush2.msra.mxu0 0.0
  %807 = vmatprep.subr.mxu0 0.0
  %808 = vmatpush2.msra.mxu0 0.0
  %809 = vmatprep.subr.mxu0 0.0
  %810 = vmatpush2.msra.mxu0 0.0
  %811 = vmatprep.subr.mxu0 0.0
  %812 = vmatpush2.msra.mxu0 0.0
  %813 = vmatprep.subr.mxu0 0.0
  %814 = vmatpush2.msra.mxu0 0.0
  %815 = vmatprep.subr.mxu0 0.0
  %816 = vmatpush2.msra.mxu0 0.0
  %817 = vmatprep.subr.mxu0 0.0
  %818 = vmatpush2.msra.mxu0 0.0
  %819 = vmatprep.mubr.f32.mxu0 0.0
  %820 = vmatmul.mubr.f32.gmra.mxu0 %v751
  %v821 = vpop.f32.mrf.mxu0
  %v822 = vadd.f32 0.0, %v821
  %v823 = vpop.f32.mrf.mxu0
  %824 = vmatprep.mubr.f32.mxu0 0.0
  %825 = vmatmul.mubr.f32.gmra.mxu0 %v752
  %v826 = vpop.f32.mrf.mxu0
  %v827 = vadd.f32 0.0, %v826
  %v828 = vpop.f32.mrf.mxu0
  %829 = vmatprep.mubr.f32.mxu0 0.0
  %830 = vmatmul.mubr.f32.gmra.mxu0 %v753
  %v831 = vpop.f32.mrf.mxu0
  %v832 = vadd.f32 0.0, %v831
  %v833 = vpop.f32.mrf.mxu0
  %834 = vmatprep.mubr.f32.mxu0 0.0
  %835 = vmatmul.mubr.f32.gmra.mxu0 %v754
  %v836 = vpop.f32.mrf.mxu0
  %v837 = vadd.f32 0.0, %v836
  %v838 = vpop.f32.mrf.mxu0
  %839 = vdwg.mxu0
  %v840 = vadd.f32 %v733, %v822
  %v841 = vadd.f32 %v738, %v827
  %v842 = vadd.f32 %v743, %v832
  %v843 = vadd.f32 %v748, %v837
  %848 = vrot.lane.b32.xlu0 %v840, 86
  %v849 = vpop.permute.xlu0 %848
  %850 = vrot.lane.b32.xlu0 %v841, 86
  %v851 = vpop.permute.xlu0 %850
  %852 = vrot.lane.b32.xlu0 %v842, 86
  %v853 = vpop.permute.xlu0 %852
  %854 = vrot.lane.b32.xlu0 %v843, 86
  %v855 = vpop.permute.xlu0 %854
  %860 = vrot.lane.b32.xlu0 %v840, 7
  %v861 = vpop.permute.xlu0 %860
  %862 = vrot.lane.b32.xlu0 %v841, 7
  %v863 = vpop.permute.xlu0 %862
  %864 = vrot.lane.b32.xlu0 %v842, 7
  %v865 = vpop.permute.xlu0 %864
  %866 = vrot.lane.b32.xlu0 %v843, 7
  %v867 = vpop.permute.xlu0 %866
  %vm872 = vcmask 56320
  %v873 = vsel %vm872, %v849, %v861
  %v874 = vsel %vm872, %v851, %v863
  %v875 = vsel %vm872, %v853, %v865
  %v876 = vsel %vm872, %v855, %v867
  %vm877 = vcmask 400384
  %878 = vst.msk [vmem:[%s2] sm:$0xff] %vm877, %v873
  %879 = vst.msk [vmem:[%s2 + $0x8] sm:$0xff] %vm877, %v874
  %880 = vst.msk [vmem:[%s2 + $0x10] sm:$0xff] %vm877, %v875
  %881 = vst.msk [vmem:[%s2 + $0x18] sm:$0xff] %vm877, %v876
  // Predicated region
  $region10: #{kernel_generated_3_forward.1} parent=0 // pred_check
    _
  $region11: #{kernel_generated_3_forward.1} parent=0 // pred_check_branch
    %883 = sbr.rel (0) target = $region13
  $region12: #{kernel_generated_3_forward.1} parent=0 // pred_region
    _
  $region13: #{kernel_generated_3_forward.1} parent=0 // pred_fallthru
    _
  // Predicated region
  $region14: #{kernel_generated_3_forward.1} parent=0 // pred_check
    _
  $region15: #{kernel_generated_3_forward.1} parent=0 // pred_check_branch
    %885 = sbr.rel (0) target = $region17
  $region16: #{kernel_generated_3_forward.1} parent=0 // pred_region
    _
  $region17: #{kernel_generated_3_forward.1} parent=0 // pred_fallthru
    _

</llo_original>
